<compile_context>
chip_gen: v7x
topology: tpu7x:2x2x1
jax: 0.10.0
libtpu: 0.0.40
codegen_flags: <defaults>
</compile_context>

<pallas_src>
import math

import jax
import jax.numpy as jnp
from jax.experimental import pallas as pl
from jax.experimental.pallas import tpu as pltpu


def _round_up(n: int, m: int) -> int:
    return ((n + m - 1) // m) * m


def _sublane_multiple(dtype) -> int:
    # f32 -> 8, bf16/f16 -> 16, int8/fp8 -> 32 (packed rows per sublane)
    return max(8, 32 // jnp.dtype(dtype).itemsize)


def _vmem_capacity_bytes() -> int:
    try:
        cap = getattr(pltpu.get_tpu_info(), "vmem_capacity_bytes", None)
        if cap:
            return int(cap)
    except Exception:
        pass
    return 64 * 1024 * 1024  # conservative (v7x per-core VMEM)


def _vmem_limit_bytes(per_step_block_bytes: int, vmem_cap: int) -> int:
    # Double-buffered pipeline footprint + headroom; explicit so v5e's 16 MiB
    # scoped default never silently shrinks pipelining.
    limit = 2 * per_step_block_bytes + (8 << 20)
    limit = max(limit, 32 << 20)
    limit = min(limit, max(vmem_cap - (8 << 20), 16 << 20))
    return int(limit)


def build_pe_table(d_model: int, max_len: int = 1024) -> jnp.ndarray:
    """Deterministic sin/cos positional-encoding table, shape (max_len, d_model)."""
    position = jnp.arange(0, max_len, dtype=jnp.float32)[:, None]               # (L, 1)
    div_term = jnp.exp(
        jnp.arange(0, d_model, 2, dtype=jnp.float32) * (-math.log(10000.0) / d_model)
    )                                                                            # (ceil(D/2),)
    pe = jnp.zeros((max_len, d_model), dtype=jnp.float32)
    pe = pe.at[:, 0::2].set(jnp.sin(position * div_term))
    # even d_model matches PyTorch exactly (odd d_model errors in PyTorch anyway)
    pe = pe.at[:, 1::2].set(jnp.cos(position * div_term[: d_model // 2]))
    return pe                                                                    # (L, D)


def _add_kernel(x_ref, pe_ref, o_ref):
    # Shape-matched (or leading-dim broadcast) elementwise VPU add.
    o_ref[...] = x_ref[...] + pe_ref[...]


def _forward_tiled(x, pe_s, target_bytes, vmem_cap):
    """D >= 128: blocks (bb, ts, D); grid (s, b) with s outermost (pe resident)."""
    B, S, D = x.shape
    dtype = x.dtype
    itemsize = jnp.dtype(dtype).itemsize
    sub = _sublane_multiple(dtype)
    row_bytes = D * itemsize

    # Sequence rows per tile, sublane-aligned, sized to the per-step byte target.
    ts = max(sub, (target_bytes // row_bytes) // sub * sub)
    bb = 1
    if ts >= S:
        ts = _round_up(S, sub)
        # Whole sequence fits one s-tile: fold a batch sub-block to keep steps big.
        bb = min(B, max(1, target_bytes // (ts * row_bytes)))

    # Megacore guard: >= 2 grid steps whenever possible (v7x has 2 TensorCores).
    if pl.cdiv(S, ts) * pl.cdiv(B, bb) < 2:
        if B >= 2:
            bb = max(1, B // 2)
        elif S > sub:
            ts = _round_up(pl.cdiv(S, 2), sub)

    # Keep batch sub-blocks evenly dividing B (no ragged leading-dim blocks).
    while B % bb:
        bb -= 1

    grid = (pl.cdiv(S, ts), B // bb)  # s OUTER -> each pe tile DMAed once total

    per_step_bytes = (2 * bb + 1) * ts * row_bytes  # x + out + pe blocks
    vmem_limit = _vmem_limit_bytes(per_step_bytes, vmem_cap)

    return pl.pallas_call(
        _add_kernel,
        out_shape=jax.ShapeDtypeStruct((B, S, D), dtype),
        grid_spec=pltpu.PrefetchScalarGridSpec(
            num_scalar_prefetch=0,
            grid=grid,
            in_specs=[
                pl.BlockSpec((bb, ts, D), lambda s, b: (b, s, 0)),  # x
                pl.BlockSpec((1, ts, D), lambda s, b: (0, s, 0)),   # pe (b-invariant)
            ],
            out_specs=pl.BlockSpec((bb, ts, D), lambda s, b: (b, s, 0)),
        ),
        compiler_params=pltpu.CompilerParams(
            dimension_semantics=("parallel", "parallel"),
            vmem_limit_bytes=vmem_limit,
        ),
    )(x, pe_s[None])


def _forward_flat(x, pe_s, target_bytes, vmem_cap):
    """D < 128: flatten (S, D) into one lane-dense axis (free, contiguous reshape)."""
    B, S, D = x.shape
    dtype = x.dtype
    itemsize = jnp.dtype(dtype).itemsize
    N = S * D

    x2 = x.reshape(B, N)
    pe2 = pe_s.reshape(1, N)

    if N <= 128:
        tile = N                      # block dim == full array dim: always legal
    else:
        tile = max(128, (target_bytes // (B * itemsize)) // 128 * 128)
        tile = min(tile, _round_up(N, 128))
        if tile >= N:                 # megacore guard: >= 2 grid steps
            tile = _round_up(pl.cdiv(N, 2), 128)

    grid = (pl.cdiv(N, tile),)
    per_step_bytes = (2 * B + 1) * tile * itemsize
    vmem_limit = _vmem_limit_bytes(per_step_bytes, vmem_cap)

    out = pl.pallas_call(
        _add_kernel,
        out_shape=jax.ShapeDtypeStruct((B, N), dtype),
        grid_spec=pltpu.PrefetchScalarGridSpec(
            num_scalar_prefetch=0,
            grid=grid,
            in_specs=[
                pl.BlockSpec((B, tile), lambda t: (0, t)),  # x, whole batch per step
                pl.BlockSpec((1, tile), lambda t: (0, t)),  # pe (broadcast over B)
            ],
            out_specs=pl.BlockSpec((B, tile), lambda t: (0, t)),
        ),
        compiler_params=pltpu.CompilerParams(
            dimension_semantics=("parallel",),
            vmem_limit_bytes=vmem_limit,
        ),
    )(x2, pe2)
    return out.reshape(B, S, D)


def positional_encoding_forward(x: jnp.ndarray, pe: jnp.ndarray) -> jnp.ndarray:
    """x: (B, S, D), pe: (max_len, D)  ->  (B, S, D) = x + pe[None, :S, :]."""
    B, S, D = x.shape
    max_len, Dp = pe.shape
    assert Dp == D and S <= max_len

    # NOTE: PyTorch promotes bf16 x + f32 buffer to f32; here pe is cast to
    # x.dtype (autocast-style). Exact for the f32 case exercised below.
    pe_s = pe[:S].astype(x.dtype)

    vmem_cap = _vmem_capacity_bytes()
    # Per-step x-tile byte target: ~4 MiB on 64 MiB-VMEM parts (v7x),
    # ~8 MiB on 128 MiB parts (v5e/v6e).
    target_bytes = (8 << 20) if vmem_cap >= (96 << 20) else (4 << 20)

    if D < 128:
        return _forward_flat(x, pe_s, target_bytes, vmem_cap)
    return _forward_tiled(x, pe_s, target_bytes, vmem_cap)


if __name__ == "__main__":
    MAX_LEN = 1024
    key = jax.random.PRNGKey(0)

    # Small-D (flattened-lane) path — module-scale test shapes.
    B, S, D = 2, 8, 32
    x = jax.random.normal(key, (B, S, D), dtype=jnp.float32)
    pe = build_pe_table(D, MAX_LEN)
    out = jax.block_until_ready(positional_encoding_forward(x, pe))
    ref = x + pe[None, :S, :]
    assert out.shape == (B, S, D)
    assert jnp.allclose(out, ref, atol=1e-6), "flat-path mismatch vs reference"

    # Realistic-D (tiled) path with a ragged sequence tile and batch sub-block.
    B2, S2, D2 = 4, 20, 256
    x2 = jax.random.normal(jax.random.PRNGKey(0), (B2, S2, D2), dtype=jnp.float32)
    pe2 = build_pe_table(D2, MAX_LEN)
    out2 = jax.block_until_ready(positional_encoding_forward(x2, pe2))
    ref2 = x2 + pe2[None, :S2, :]
    assert out2.shape == (B2, S2, D2)
    assert jnp.allclose(out2, ref2, atol=1e-6), "tiled-path mismatch vs reference"

    print("KERNEL_OK")
</pallas_src>

<mosaic_0001>
module attributes {stable_mosaic.version = 11 : i64} {
  func.func @_add_kernel(%arg0: i32, %arg1: memref<2x128xf32, #tpu.memory_space<vmem>>, %arg2: memref<1x128xf32, #tpu.memory_space<vmem>>, %arg3: memref<2x128xf32, #tpu.memory_space<vmem>>) attributes {dimension_semantics = [#tpu.dimension_semantics<parallel>], iteration_bounds = array<i64: 2>, scalar_prefetch = 0 : i64, scratch_operands = 0 : i64, tpu.core_type = #tpu.core_type<tc>, window_params = [{transform_indices = @transform_0, window_bounds = array<i64: 2, 128>}, {transform_indices = @transform_1, window_bounds = array<i64: 1, 128>}, {transform_indices = @transform_2, window_bounds = array<i64: 2, 128>}]} {
    %c0 = arith.constant 0 : index
    %c0_0 = arith.constant 0 : index
    %0 = vector.load %arg1[%c0, %c0_0] : memref<2x128xf32, #tpu.memory_space<vmem>>, vector<2x128xf32>
    %c0_1 = arith.constant 0 : index
    %c0_2 = arith.constant 0 : index
    %1 = vector.load %arg2[%c0_1, %c0_2] : memref<1x128xf32, #tpu.memory_space<vmem>>, vector<1x128xf32>
    %2 = vector.broadcast %1 : vector<1x128xf32> to vector<2x128xf32>
    %3 = arith.addf %0, %2 : vector<2x128xf32>
    %c0_3 = arith.constant 0 : index
    %c0_4 = arith.constant 0 : index
    %4 = vector.load %arg3[%c0_3, %c0_4] : memref<2x128xf32, #tpu.memory_space<vmem>>, vector<2x128xf32>
    tpu.vector_store %arg3[%c0_3, %c0_4], %3 {strides = array<i32>} : memref<2x128xf32, #tpu.memory_space<vmem>>, vector<2x128xf32>,
    return
  }
  func.func @transform_0(%arg0: i32) -> (i32, i32) {
    %c0_i32 = arith.constant 0 : i32
    %c0_i32_0 = arith.constant 0 : i32
    return %c0_i32, %arg0 : i32, i32
  }
  func.func @transform_1(%arg0: i32) -> (i32, i32) {
    %c0_i32 = arith.constant 0 : i32
    %c0_i32_0 = arith.constant 0 : i32
    return %c0_i32, %arg0 : i32, i32
  }
  func.func @transform_2(%arg0: i32) -> (i32, i32) {
    %c0_i32 = arith.constant 0 : i32
    %c0_i32_0 = arith.constant 0 : i32
    return %c0_i32, %arg0 : i32, i32
  }
}

</mosaic_0001>

<llo_original>
// kernel: tpu_custom_call.1
$region0: #{tpu_custom_call.1}
  #allocation0 [shape = 'u32[]', space=smem, size = 0x4, offset = 0x4, fixed_abs, tag = 'smem constant byte address 0x4 - core index']
  #allocation1 [shape = 'u32[144,128]{1,0:T(1,128)}', space=vmem, size = 0x12000, scoped, tag = 'internal scratch']
  %s0 = inlined_call_operand.hbm [shape: f32[2,256], index: 0, kind: input, shape index: {}]
  %s1 = inlined_call_operand.vmem [shape: f32[1,256], index: 1, kind: input, shape index: {}]
  %s2 = inlined_call_operand.hbm [shape: f32[2,256], index: 2, kind: output, shape index: {}]
  %s3 = sld [smem:[#allocation0]]
  $region45: #{tpu_custom_call.1} parent=0
    _
  %s5 = ssub.s32 1, %s3
  %s6 = scalar_select 0, %s5, %s3
  $region1: #{tpu_custom_call.1} parent=0
    #allocation2 [shape = 'u8[2048]{0}', space=vmem, size = 0x800, scoped, tag = 'input window, operand 0']
    #allocation3 [shape = 's32[2]{0}', space=sflag, size = 0x8, scoped, tag = 'scoped memory for tpu_custom_call.1']
    #allocation4 [shape = 's32[2]{0}', space=sflag, size = 0x8, scoped, tag = 'scoped memory for tpu_custom_call.1']
    #allocation5 [shape = 'u8[2048]{0}', space=vmem, size = 0x800, scoped, tag = 'output window, operand 0']
    %7 = vsyncpa [#allocation3], 0
    %s8 = scalar_lea.sflag [#allocation3], 1
    %9 = vsyncpa %s8, 0
    %10 = vsyncpa [#allocation4], 0
    %s11 = scalar_lea.sflag [#allocation4], 1
    %12 = vsyncpa %s11, 0
    loop: start=0, step=1, limit=4
    $region2: #{tpu_custom_call.1} parent=1 // loop_pre_header
      _
    $region3: #{tpu_custom_call.1} parent=1 // loop_header
      %s14 = sphi 0, %s18
      %p15 = scmp.ge.s32.totalorder %s14, 4
      %s24 = sphi 0, %s26
      %s27 = sphi 0, %s24
      %s28 = sphi 0, %s27
      %s44 = sphi 0, %s28
      %s50 = sphi 0, %s52
      %s53 = sphi 0, %s50
      %s54 = sphi 0, %s53
      %s70 = sphi 0, %s54
      %s76 = sphi 0, %s78
      %s79 = sphi 0, %s76
      %s80 = sphi 0, %s79
      %s96 = sphi 0, %s80
    $region4: #{tpu_custom_call.1} parent=1 // loop_header_branch
      %17 = sbr.rel (%p15) target = $region8
    $region5: #{tpu_custom_call.1} parent=1 // loop_body
      %s19 = ssub.s32 %s14, 1
      %s20 = ssub.s32 %s14, 2
      %s21 = sadd.s32 %s14, 1
      %s22 = ssub.s32 %s14, %s21
      %p23 = scmp.eq.s32.totalorder %s22, 0
      %s25 = sadd.s32 %s24, 1
      %s26 = scalar_select %p23, %s24, %s25
      %p29 = pneg %p23
      %p30 = scmp.eq.s32.totalorder %s14, 1
      %p31 = por %p29, %p30
      %p32 = scmp.ne.s32.totalorder %s24, %s27
      %p33 = scmp.eq.s32.totalorder %s14, 0
      %p34 = por %p32, %p33
      %p35 = scmp.ne.s32.totalorder %s24, %s27
      %p36 = scmp.eq.s32.totalorder %s19, 1
      %p37 = por %p35, %p36
      %p38 = scmp.ne.s32.totalorder %s27, %s28
      %p39 = scmp.eq.s32.totalorder %s19, 0
      %p40 = por %p38, %p39
      %p41 = scmp.ne.s32.totalorder %s27, %s28
      %p42 = scmp.eq.s32.totalorder %s20, 1
      %p43 = por %p41, %p42
      %p45 = scmp.ne.s32.totalorder %s28, %s44
      %p46 = scmp.eq.s32.totalorder %s20, 0
      %p47 = por %p45, %p46
      %s48 = ssub.s32 %s14, %s21
      %p49 = scmp.eq.s32.totalorder %s48, 0
      %s51 = sadd.s32 %s50, 1
      %s52 = scalar_select %p49, %s50, %s51
      %p55 = pneg %p49
      %p56 = scmp.eq.s32.totalorder %s14, 1
      %p57 = por %p55, %p56
      %p58 = scmp.ne.s32.totalorder %s50, %s53
      %p59 = scmp.eq.s32.totalorder %s14, 0
      %p60 = por %p58, %p59
      %p61 = scmp.ne.s32.totalorder %s50, %s53
      %p62 = scmp.eq.s32.totalorder %s19, 1
      %p63 = por %p61, %p62
      %p64 = scmp.ne.s32.totalorder %s53, %s54
      %p65 = scmp.eq.s32.totalorder %s19, 0
      %p66 = por %p64, %p65
      %p67 = scmp.ne.s32.totalorder %s53, %s54
      %p68 = scmp.eq.s32.totalorder %s20, 1
      %p69 = por %p67, %p68
      %p71 = scmp.ne.s32.totalorder %s54, %s70
      %p72 = scmp.eq.s32.totalorder %s20, 0
      %p73 = por %p71, %p72
      %s74 = ssub.s32 %s14, %s21
      %p75 = scmp.eq.s32.totalorder %s74, 0
      %s77 = sadd.s32 %s76, 1
      %s78 = scalar_select %p75, %s76, %s77
      %p81 = pneg %p75
      %p82 = scmp.eq.s32.totalorder %s14, 1
      %p83 = por %p81, %p82
      %p84 = scmp.ne.s32.totalorder %s76, %s79
      %p85 = scmp.eq.s32.totalorder %s14, 0
      %p86 = por %p84, %p85
      %p87 = scmp.ne.s32.totalorder %s76, %s79
      %p88 = scmp.eq.s32.totalorder %s19, 1
      %p89 = por %p87, %p88
      %p90 = scmp.ne.s32.totalorder %s79, %s80
      %p91 = scmp.eq.s32.totalorder %s19, 0
      %p92 = por %p90, %p91
      %p93 = scmp.ne.s32.totalorder %s79, %s80
      %p94 = scmp.eq.s32.totalorder %s20, 1
      %p95 = por %p93, %p94
      %p97 = scmp.ne.s32.totalorder %s80, %s96
      %p98 = scmp.eq.s32.totalorder %s20, 0
      %p99 = por %p97, %p98
      %p100 = scmp.le.s32.totalorder 1, %s14
      %p101 = scmp.lt.s32.totalorder %s14, 3
      %p102 = pnand %p100, %p101
      %p103 = pneg %p102
      // Predicated region
      $region9: #{tpu_custom_call.1} parent=5 // pred_check
        _
      $region10: #{tpu_custom_call.1} parent=5 // pred_check_branch
        %105 = sbr.rel (%p102) target = $region12
      $region11: #{tpu_custom_call.1} parent=5 // pred_region
        %s106 = ssub.s32 %s14, 1
      $region12: #{tpu_custom_call.1} parent=5 // pred_fallthru
        _
      %p107 = scmp.lt.s32.totalorder %s14, 2
      // Predicated region
      $region13: #{tpu_custom_call.1} parent=5 // pred_check
        %p108 = pneg %p107
      $region14: #{tpu_custom_call.1} parent=5 // pred_check_branch
        %110 = sbr.rel (%p108) target = $region16
      $region15: #{tpu_custom_call.1} parent=5 // pred_region
        // Predicated region
        $region17: #{tpu_custom_call.1} parent=15 // pred_check
          %p111 = pneg %p34
        $region18: #{tpu_custom_call.1} parent=15 // pred_check_branch
          %113 = sbr.rel (%p111) target = $region20
        $region19: #{tpu_custom_call.1} parent=15 // pred_region
          %s114 = sand.u32 %s24, 1
          %s115 = scalar_lea.sflag [#allocation3], %s114
          %s116 = sand.u32 %s24, 1
          %s117 = smul.addr %s116, 2
          %s118 = scalar_lea.vmem [#allocation2], %s117
          %s120 = ssub.s32 32, 32
          %121 = vsyncadd %s115, %s120
          %s122 = smul.addr %s14, 32
          %s123 = scalar_lea.hbm %s0, %s122
          %s125 = sshll.u32 %s118, 4
          %s126 = int_to_ptr.vmem [resolvable:$true] %s125
          %128 = dma.hbm_to_vmem [thread:$0]  %s123, 32, %s126, %s115
        $region20: #{tpu_custom_call.1} parent=15 // pred_fallthru
          _
        // Predicated region
        $region21: #{tpu_custom_call.1} parent=15 // pred_check
          %p129 = pneg %p60
        $region22: #{tpu_custom_call.1} parent=15 // pred_check_branch
          %131 = sbr.rel (%p129) target = $region24
        $region23: #{tpu_custom_call.1} parent=15 // pred_region
          %p132 = scmp.lt.s32.totalorder %s14, 1
          %s133 = scalar_select %p132, %s14, 1
          %s134 = scalar_lea.vmem %s1, %s133
        $region24: #{tpu_custom_call.1} parent=15 // pred_fallthru
          _
      $region16: #{tpu_custom_call.1} parent=5 // pred_fallthru
        _
      %p135 = scmp.le.s32.totalorder 1, %s14
      %p136 = scmp.lt.s32.totalorder %s14, 3
      %p137 = pnand %p135, %p136
      %p138 = pneg %p137
      // Predicated region
      $region25: #{tpu_custom_call.1} parent=5 // pred_check
        _
      $region26: #{tpu_custom_call.1} parent=5 // pred_check_branch
        %140 = sbr.rel (%p137) target = $region28
      $region27: #{tpu_custom_call.1} parent=5 // pred_region
        %s141 = ssub.s32 %s14, 1
        %s142 = sand.u32 %s27, 1
        %s143 = scalar_lea.sflag [#allocation3], %s142
        %s144 = sand.u32 %s27, 1
        %s145 = smul.addr %s144, 2
        %s146 = scalar_lea.vmem [#allocation2], %s145
        // Predicated region
        $region29: #{tpu_custom_call.1} parent=27 // pred_check
          %p147 = pneg %p40
        $region30: #{tpu_custom_call.1} parent=27 // pred_check_branch
          %149 = sbr.rel (%p147) target = $region32
        $region31: #{tpu_custom_call.1} parent=27 // pred_region
          %150 = dma.done %s143, 32
        $region32: #{tpu_custom_call.1} parent=27 // pred_fallthru
          _
        %s151 = sand.u32 %s27, 1
        %s152 = scalar_lea.sflag [#allocation3], %s151
        %s153 = sand.u32 %s27, 1
        %s154 = smul.addr %s153, 2
        %s155 = scalar_lea.vmem [#allocation2], %s154
        %p156 = pneg %p40
        %p157 = pneg %p37
        %p158 = scmp.lt.s32.totalorder %s19, 1
        %s159 = scalar_select %p158, %s19, 1
        %s160 = scalar_lea.vmem %s1, %s159
        %p161 = pneg %p66
        %p162 = pneg %p63
        %p163 = pneg %p92
        %p164 = pneg %p89
        %s165 = sand.u32 %s79, 1
        %s166 = scalar_lea.sflag [#allocation4], %s165
        %s167 = sand.u32 %s79, 1
        %s168 = smul.addr %s167, 2
        %s169 = scalar_lea.vmem [#allocation5], %s168
        %p170 = scmp.lt.s32.totalorder %s19, 1
        %s171 = scalar_select %p170, %s19, 1
        %s172 = scalar_lea.vmem %s1, %s171
        %v173 = vld [vmem:[%s146] sm:$0x3]
        %v174 = vld [vmem:[%s172] sm:$0x1]
        %v176 = vlaneseq
        %v177 = vshrl.u32 %v176, 7
        %v178 = vsub.s32 0, %v177
        %v179 = vrot.slane %v174, %v178
        %v181 = vadd.f32 %v173, %v179
        %182 = vst [vmem:[%s169] sm:$0x3] %v181
        %s183 = sand.u32 %s79, 1
        %s184 = scalar_lea.sflag [#allocation4], %s183
        %s185 = sand.u32 %s79, 1
        %s186 = smul.addr %s185, 2
        %s187 = scalar_lea.vmem [#allocation5], %s186
        // Predicated region
        $region33: #{tpu_custom_call.1} parent=27 // pred_check
          %p188 = pneg %p89
        $region34: #{tpu_custom_call.1} parent=27 // pred_check_branch
          %190 = sbr.rel (%p188) target = $region36
        $region35: #{tpu_custom_call.1} parent=27 // pred_region
          %s192 = ssub.s32 32, 32
          %193 = vsyncadd %s184, %s192
          %s194 = smul.addr %s19, 32
          %s195 = scalar_lea.hbm %s2, %s194
          %s197 = sshll.u32 %s187, 4
          %s198 = int_to_ptr.vmem [resolvable:$true] %s197
          %200 = dma.vmem_to_hbm [thread:$0]  %s198, 32, %s195, %s184
        $region36: #{tpu_custom_call.1} parent=27 // pred_fallthru
          _
      $region28: #{tpu_custom_call.1} parent=5 // pred_fallthru
        _
      %p201 = scmp.le.s32.totalorder 2, %s14
      // Predicated region
      $region37: #{tpu_custom_call.1} parent=5 // pred_check
        %p202 = pneg %p201
      $region38: #{tpu_custom_call.1} parent=5 // pred_check_branch
        %204 = sbr.rel (%p202) target = $region40
      $region39: #{tpu_custom_call.1} parent=5 // pred_region
        %s205 = ssub.s32 %s14, 2
        // Predicated region
        $region41: #{tpu_custom_call.1} parent=39 // pred_check
          %p206 = pneg %p95
        $region42: #{tpu_custom_call.1} parent=39 // pred_check_branch
          %208 = sbr.rel (%p206) target = $region44
        $region43: #{tpu_custom_call.1} parent=39 // pred_region
          %s209 = sand.u32 %s80, 1
          %s210 = scalar_lea.sflag [#allocation4], %s209
          %s211 = sand.u32 %s80, 1
          %s212 = smul.addr %s211, 2
          %s213 = scalar_lea.vmem [#allocation5], %s212
          %214 = dma.done %s210, 32
        $region44: #{tpu_custom_call.1} parent=39 // pred_fallthru
          _
      $region40: #{tpu_custom_call.1} parent=5 // pred_fallthru
        _
    $region6: #{tpu_custom_call.1} parent=1 // loop_footer
      %s18 = sadd.s32 1, %s14
    $region7: #{tpu_custom_call.1} parent=1 // loop_footer_branch
      %13 = sbr.rel target = $region3
    $region8: #{tpu_custom_call.1} parent=1 // loop_exit
      _
    %215 = vsyncpa [#allocation3], 1
    %s216 = scalar_lea.sflag [#allocation3], 1
    %217 = vsyncpa %s216, 1
    %218 = vsyncpa [#allocation4], 1
    %s219 = scalar_lea.sflag [#allocation4], 1
    %220 = vsyncpa %s219, 1

</llo_original>
